<compile_context>
chip_gen: v5e
topology: v5e:2x2
jax: 0.10.0
libtpu: 0.0.40
codegen_flags: <defaults>
</compile_context>

<pallas_src>
import functools
import math

import jax
import jax.numpy as jnp
from jax import lax
from jax.experimental import pallas as pl
from jax.experimental.pallas import tpu as pltpu


# ---------------------------------------------------------------------------
# Fused kernel: SCB (block-diag conv + folded BN + SiLU) -> chunked unbiased
# variance -> head (Linear with flatten folded into weights) -> LogSoftmax.
# Grid: (ceil(B / TB),); each step handles TB examples.
# ---------------------------------------------------------------------------
def fbcnet_kernel(x_ref, w_ref, shift_ref, c_ref, ct_ref, w3_ref, b_ref, o_ref,
                  *, S, TB, chunk):
    # Grouped (nChan,1) conv over all bands == one block-diagonal matmul.
    # bf16 inputs, f32 accumulation.  BN scale is folded into w; conv bias +
    # BN shift folded into `shift`.
    y = jnp.dot(w_ref[...], x_ref[...],
                preferred_element_type=jnp.float32)            # (m_total, TB*nTime)
    y = y + shift_ref[...]
    y = y * jax.nn.sigmoid(y)                                   # SiLU (EUP)

    # Unbiased per-(filter, example, chunk) variance, two-pass (subtract the
    # chunk mean before squaring), all on the MXU via the precomputed chunk
    # one-hot matrices.  Columns are chunk-major: column index = s*TB + b.
    inv_chunk = 1.0 / chunk
    inv_dof = 1.0 / (chunk - 1)
    C = c_ref[...]                                              # (TB*nTime, S*TB)
    s1 = jnp.dot(y, C, preferred_element_type=jnp.float32)      # (m_total, S*TB)
    mean = s1 * inv_chunk
    mean_t = jnp.dot(mean, ct_ref[...],
                     preferred_element_type=jnp.float32)        # (m_total, TB*nTime)
    d = y - mean_t
    var = jnp.dot(d * d, C, preferred_element_type=jnp.float32) * inv_dof

    # Head: the torch flatten (feature f = filter*S + chunk) is folded into
    # the head weights (S, nClass, m_total) in glue, so logits^T accumulate
    # as S tiny MXU dots -- no flatten/iota-mask work in the kernel.
    nclass = w3_ref.shape[1]
    acc = jnp.zeros((nclass, TB), jnp.float32)
    for s in range(S):                                          # S is small & static
        acc = acc + jnp.dot(w3_ref[s], var[:, s * TB:(s + 1) * TB],
                            preferred_element_type=jnp.float32)
    logits = acc + b_ref[...]                                   # (nClass, TB)

    # LogSoftmax over the class (sublane) axis.
    mx = jnp.max(logits, axis=0, keepdims=True)
    z = logits - mx
    lse = jnp.log(jnp.sum(jnp.exp(z), axis=0, keepdims=True))
    o_ref[:, :TB] = z - lse                                     # rest of the 128-lane
                                                                # block is sliced off
                                                                # in the wrapper


# ---------------------------------------------------------------------------
# Glue helpers
# ---------------------------------------------------------------------------
def renorm_rows(w, max_norm):
    """torch.renorm(p=2, dim=0, maxnorm): rows with L2 norm > max_norm are
    rescaled to exactly max_norm."""
    flat = w.reshape(w.shape[0], -1)
    norm = jnp.sqrt(jnp.sum(flat * flat, axis=1, keepdims=True))
    scale = jnp.where(norm > max_norm, max_norm / jnp.maximum(norm, 1e-12), 1.0)
    return (flat * scale).reshape(w.shape)


def _step_vmem_bytes(TB, nTime, S, K, m_total):
    lanes = TB * nTime
    x_blk = K * lanes * 2                    # bf16 input tile (double-buffered x2)
    c_blk = lanes * S * TB * 4               # chunk one-hot (+ transpose)
    act = 5 * m_total * lanes * 4            # y, mean_t, d, d*d, misc f32
    return 2 * x_blk + 4 * c_blk + act + 2 * m_total * K * 2


def _choose_tb(B, nTime, S, K, m_total, budget_bytes=20 * 2**20):
    """Pick the per-step batch tile: TB*nTime a multiple of 128 where possible,
    >= 2 grid steps when possible (v7x has 2 TensorCores), and capped by a VMEM
    budget that is safe on v7x's 64 MiB VMEM."""
    tb0 = 128 // math.gcd(nTime, 128)
    if tb0 >= B:
        return B                 # single step; block == full array dims (allowed)
    tb = tb0
    while True:
        nxt = tb * 2
        if nxt > max(tb0, B // 2):               # keep >= 2 grid steps
            break
        if nxt * nTime > 4096:                   # plenty of lane density already
            break
        if _step_vmem_bytes(nxt, nTime, S, K, m_total) > budget_bytes:
            break
        tb = nxt
    return tb


def _chunk_onehots(TB, nTime, S, chunk):
    """C[j, s*TB + b] = 1 iff batched-time column j (= b*nTime + t) belongs to
    example b and time-chunk s = t // chunk.  Built once in glue (constant)."""
    j = jnp.arange(TB * nTime)
    b_of = j // nTime
    s_of = (j % nTime) // chunk
    cols = jnp.arange(S * TB)
    C = ((cols[None, :] // TB == s_of[:, None])
         & (cols[None, :] % TB == b_of[:, None])).astype(jnp.float32)
    return C, C.T


def fbcnet_forward(x, params, *, nBands, m, strideFactor):
    """x: (B, 1, nChan, nTime, nBands) float32 -> (B, nClass) log-probs."""
    B, _, nChan, nTime, nB2 = x.shape
    assert nB2 == nBands
    S = strideFactor
    assert nTime % S == 0
    chunk = nTime // S
    assert chunk > 1, "unbiased variance needs more than one sample per chunk"
    m_total = m * nBands
    K = nBands * nChan

    # --- batch tiling ---
    TB = _choose_tb(B, nTime, S, K, m_total)
    Bp = ((B + TB - 1) // TB) * TB
    G = Bp // TB
    OUT_LANES = max(128, ((TB + 127) // 128) * 128)

    # --- input relayout: (B,1,nChan,nTime,nBands) -> (nBands*nChan, Bp*nTime)
    # (torch: permute((0,4,2,3,1)).squeeze(4)); bands stacked on rows, batch
    # folded into lanes.  allow_input_fusion lets XLA fuse this relayout into
    # the pallas_call operand.  Cast to bf16 (halves x DMA bytes).
    xp = jnp.transpose(x[:, 0], (3, 1, 0, 2))            # (nBands, nChan, B, nTime)
    if Bp > B:
        xp = jnp.pad(xp, ((0, 0), (0, 0), (0, Bp - B), (0, 0)))
    xr = xp.reshape(K, Bp * nTime).astype(jnp.bfloat16)

    # --- parameter preprocessing (deterministic glue) ---
    conv_w = renorm_rows(params["conv_w"].reshape(m_total, -1), 2.0)
    eps = 1e-5
    bn_scale = params["bn_gamma"] / jnp.sqrt(params["bn_var"] + eps)      # (m_total,)
    bn_shift = params["bn_beta"] - params["bn_mean"] * bn_scale
    shift = (bn_scale * params["conv_b"] + bn_shift).reshape(m_total, 1)
    w_scaled = conv_w * bn_scale[:, None]                                 # (m_total, nChan)
    # Block-diagonal grouped-conv weight: row r = g*m + j uses band g only.
    w_bd = (w_scaled.reshape(nBands, m, nChan)[:, :, None, :]
            * jnp.eye(nBands, dtype=jnp.float32)[:, None, :, None])
    w_bd = w_bd.reshape(m_total, K).astype(jnp.bfloat16)

    # Head: Linear (max_norm=0.5); flatten order f = filter*S + chunk folded in.
    lin_w = renorm_rows(params["lin_w"], 0.5)                             # (nClass, F)
    nClass = lin_w.shape[0]
    w3 = jnp.transpose(lin_w.reshape(nClass, m_total, S), (2, 0, 1))      # (S,nClass,m_total)
    bh = params["lin_b"].reshape(nClass, 1)

    # --- constant chunk one-hots (built once; constant index_map) ---
    C, CT = _chunk_onehots(TB, nTime, S, chunk)

    vmem_limit = int(min(max(4 * _step_vmem_bytes(TB, nTime, S, K, m_total),
                             32 * 2**20), 48 * 2**20))

    out_full = pl.pallas_call(
        functools.partial(fbcnet_kernel, S=S, TB=TB, chunk=chunk),
        out_shape=jax.ShapeDtypeStruct((nClass, G * OUT_LANES), jnp.float32),
        grid_spec=pltpu.PrefetchScalarGridSpec(
            num_scalar_prefetch=0,
            grid=(G,),
            in_specs=[
                pl.BlockSpec((K, TB * nTime), lambda g: (0, g)),          # x tile
                pl.BlockSpec((m_total, K), lambda g: (0, 0)),             # conv w
                pl.BlockSpec((m_total, 1), lambda g: (0, 0)),             # shift
                pl.BlockSpec((TB * nTime, S * TB), lambda g: (0, 0)),     # C
                pl.BlockSpec((S * TB, TB * nTime), lambda g: (0, 0)),     # C^T
                pl.BlockSpec((S, nClass, m_total), lambda g: (0, 0, 0)),  # head w
                pl.BlockSpec((nClass, 1), lambda g: (0, 0)),              # head b
            ],
            out_specs=pl.BlockSpec((nClass, OUT_LANES), lambda g: (0, g)),
        ),
        compiler_params=pltpu.CompilerParams(
            dimension_semantics=("parallel",),     # batch tiles shard across TCs
            vmem_limit_bytes=vmem_limit,
            allow_input_fusion=[True, False, False, False, False, False, False],
        ),
    )(xr, w_bd, shift, C, CT, w3, bh)

    out = out_full.reshape(nClass, G, OUT_LANES)[:, :, :TB].reshape(nClass, Bp)
    return out.T[:B]                               # (B, nClass) log-probs


# ---------------------------------------------------------------------------
# Pure-JAX reference (mirrors the PyTorch forward) for validation.
# ---------------------------------------------------------------------------
def reference_forward(x, params, *, nBands, m, strideFactor):
    B, _, nChan, nTime, _ = x.shape
    S = strideFactor
    chunk = nTime // S
    m_total = m * nBands
    xp = jnp.transpose(x, (0, 4, 2, 3, 1))[..., 0]        # (B, nBands, nChan, nTime)
    cw = renorm_rows(params["conv_w"], 2.0).reshape(nBands, m, nChan)
    y = jnp.einsum('bgct,gjc->bgjt', xp, cw,
                   precision=lax.Precision.HIGHEST).reshape(B, m_total, nTime)
    y = y + params["conv_b"][None, :, None]
    scale = params["bn_gamma"] / jnp.sqrt(params["bn_var"] + 1e-5)
    sh = params["bn_beta"] - params["bn_mean"] * scale
    y = y * scale[None, :, None] + sh[None, :, None]
    y = y * jax.nn.sigmoid(y)
    var = jnp.var(y.reshape(B, m_total, S, chunk), axis=3, ddof=1)
    feat = var.reshape(B, m_total * S)
    lw = renorm_rows(params["lin_w"], 0.5)
    logits = jnp.dot(feat, lw.T, precision=lax.Precision.HIGHEST) \
        + params["lin_b"][None, :]
    return jax.nn.log_softmax(logits, axis=1)


def init_params(key, *, nChan, nBands, m, nClass, strideFactor):
    F = m * nBands * strideFactor
    k = jax.random.split(key, 8)
    return {
        "conv_w": 0.1 * jax.random.normal(k[0], (m * nBands, nChan), jnp.float32),
        "conv_b": 0.1 * jax.random.normal(k[1], (m * nBands,), jnp.float32),
        "bn_gamma": 1.0 + 0.1 * jax.random.normal(k[2], (m * nBands,), jnp.float32),
        "bn_beta": 0.1 * jax.random.normal(k[3], (m * nBands,), jnp.float32),
        "bn_mean": 0.05 * jax.random.normal(k[4], (m * nBands,), jnp.float32),
        "bn_var": jnp.abs(1.0 + 0.1 * jax.random.normal(k[5], (m * nBands,),
                                                        jnp.float32)),
        "lin_w": 0.1 * jax.random.normal(k[6], (nClass, F), jnp.float32),
        "lin_b": 0.1 * jax.random.normal(k[7], (nClass,), jnp.float32),
    }


if __name__ == "__main__":
    # Small shapes consistent with the module: batch x 1 x chan x time x band.
    # B=8 so the batched grid has >= 2 lane-dense (128-lane) steps.
    B, nChan, nTime, nBands, m, nClass, strideFactor = 8, 4, 32, 4, 8, 2, 4

    key = jax.random.PRNGKey(0)
    kx, kp = jax.random.split(key)
    x = jax.random.normal(kx, (B, 1, nChan, nTime, nBands), jnp.float32)
    params = init_params(kp, nChan=nChan, nBands=nBands, m=m, nClass=nClass,
                         strideFactor=strideFactor)

    out = fbcnet_forward(x, params, nBands=nBands, m=m,
                         strideFactor=strideFactor)
    out = jax.block_until_ready(out)
    assert out.shape == (B, nClass)
    # log-softmax rows should (approximately) exp-sum to 1
    assert jnp.allclose(jnp.sum(jnp.exp(out), axis=1), 1.0, atol=1e-4)
    # match the pure-JAX reference of the PyTorch forward (bf16 conv inputs,
    # f32 accumulation -> slightly looser tolerance)
    ref = reference_forward(x, params, nBands=nBands, m=m,
                            strideFactor=strideFactor)
    assert jnp.allclose(out, ref, atol=1e-2), float(jnp.max(jnp.abs(out - ref)))
    print("KERNEL_OK")
</pallas_src>

<mosaic_0001>
module attributes {stable_mosaic.version = 11 : i64} {
  func.func @fbcnet_kernel(%arg0: i32, %arg1: memref<16x128xbf16, #tpu.memory_space<vmem>>, %arg2: memref<32x16xbf16, #tpu.memory_space<vmem>>, %arg3: memref<32x1xf32, #tpu.memory_space<vmem>>, %arg4: memref<128x16xf32, #tpu.memory_space<vmem>>, %arg5: memref<16x128xf32, #tpu.memory_space<vmem>>, %arg6: memref<4x2x32xf32, #tpu.memory_space<vmem>>, %arg7: memref<2x1xf32, #tpu.memory_space<vmem>>, %arg8: memref<2x128xf32, #tpu.memory_space<vmem>>) attributes {dimension_semantics = [#tpu.dimension_semantics<parallel>], iteration_bounds = array<i64: 2>, scalar_prefetch = 0 : i64, scratch_operands = 0 : i64, tpu.core_type = #tpu.core_type<tc>, window_params = [{transform_indices = @transform_0, window_bounds = array<i64: 16, 128>}, {pipeline_mode = #tpu.pipeline_mode<synchronous>, transform_indices = @transform_1, window_bounds = array<i64: 32, 16>}, {pipeline_mode = #tpu.pipeline_mode<synchronous>, transform_indices = @transform_2, window_bounds = array<i64: 32, 1>}, {pipeline_mode = #tpu.pipeline_mode<synchronous>, transform_indices = @transform_3, window_bounds = array<i64: 128, 16>}, {pipeline_mode = #tpu.pipeline_mode<synchronous>, transform_indices = @transform_4, window_bounds = array<i64: 16, 128>}, {pipeline_mode = #tpu.pipeline_mode<synchronous>, transform_indices = @transform_5, window_bounds = array<i64: 4, 2, 32>}, {pipeline_mode = #tpu.pipeline_mode<synchronous>, transform_indices = @transform_6, window_bounds = array<i64: 2, 1>}, {transform_indices = @transform_7, window_bounds = array<i64: 2, 128>}]} {
    %c0 = arith.constant 0 : index
    %c0_0 = arith.constant 0 : index
    %0 = vector.load %arg2[%c0, %c0_0] : memref<32x16xbf16, #tpu.memory_space<vmem>>, vector<32x16xbf16>
    %c0_1 = arith.constant 0 : index
    %c0_2 = arith.constant 0 : index
    %1 = vector.load %arg1[%c0_1, %c0_2] : memref<16x128xbf16, #tpu.memory_space<vmem>>, vector<16x128xbf16>
    %cst = arith.constant dense<0.000000e+00> : vector<32x128xf32>
    %2 = tpu.matmul %0, %1, %cst {dimension_numbers = #tpu.dot_dimension_numbers<[1], [0], [0], [1], [0, 0, 1, 1], [], []>} : vector<32x16xbf16>, vector<16x128xbf16>, vector<32x128xf32> -> vector<32x128xf32>
    %c0_3 = arith.constant 0 : index
    %c0_4 = arith.constant 0 : index
    %3 = vector.load %arg3[%c0_3, %c0_4] : memref<32x1xf32, #tpu.memory_space<vmem>>, vector<32x1xf32>
    %4 = vector.broadcast %3 : vector<32x1xf32> to vector<32x128xf32>
    %5 = arith.addf %2, %4 : vector<32x128xf32>
    %6 = arith.negf %5 : vector<32x128xf32>
    %7 = math.exp %6 : vector<32x128xf32>
    %cst_5 = arith.constant 1.000000e+00 : f32
    %8 = vector.broadcast %cst_5 : f32 to vector<32x128xf32>
    %9 = arith.addf %8, %7 : vector<32x128xf32>
    %10 = arith.divf %8, %9 : vector<32x128xf32>
    %11 = arith.mulf %5, %10 : vector<32x128xf32>
    %c0_6 = arith.constant 0 : index
    %c0_7 = arith.constant 0 : index
    %12 = vector.load %arg4[%c0_6, %c0_7] : memref<128x16xf32, #tpu.memory_space<vmem>>, vector<128x16xf32>
    %cst_8 = arith.constant dense<0.000000e+00> : vector<32x16xf32>
    %13 = tpu.matmul %11, %12, %cst_8 {dimension_numbers = #tpu.dot_dimension_numbers<[1], [0], [0], [1], [0, 0, 1, 1], [], []>} : vector<32x128xf32>, vector<128x16xf32>, vector<32x16xf32> -> vector<32x16xf32>
    %cst_9 = arith.constant 1.250000e-01 : f32
    %14 = vector.broadcast %cst_9 : f32 to vector<32x16xf32>
    %15 = arith.mulf %13, %14 : vector<32x16xf32>
    %c0_10 = arith.constant 0 : index
    %c0_11 = arith.constant 0 : index
    %16 = vector.load %arg5[%c0_10, %c0_11] : memref<16x128xf32, #tpu.memory_space<vmem>>, vector<16x128xf32>
    %cst_12 = arith.constant dense<0.000000e+00> : vector<32x128xf32>
    %17 = tpu.matmul %15, %16, %cst_12 {dimension_numbers = #tpu.dot_dimension_numbers<[1], [0], [0], [1], [0, 0, 1, 1], [], []>} : vector<32x16xf32>, vector<16x128xf32>, vector<32x128xf32> -> vector<32x128xf32>
    %18 = arith.subf %11, %17 : vector<32x128xf32>
    %19 = arith.mulf %18, %18 : vector<32x128xf32>
    %cst_13 = arith.constant dense<0.000000e+00> : vector<32x16xf32>
    %20 = tpu.matmul %19, %12, %cst_13 {dimension_numbers = #tpu.dot_dimension_numbers<[1], [0], [0], [1], [0, 0, 1, 1], [], []>} : vector<32x128xf32>, vector<128x16xf32>, vector<32x16xf32> -> vector<32x16xf32>
    %cst_14 = arith.constant 0.142857149 : f32
    %21 = vector.broadcast %cst_14 : f32 to vector<32x16xf32>
    %22 = arith.mulf %20, %21 : vector<32x16xf32>
    %cst_15 = arith.constant 0.000000e+00 : f32
    %23 = vector.broadcast %cst_15 : f32 to vector<2x4xf32>
    %c0_16 = arith.constant 0 : index
    %c0_17 = arith.constant 0 : index
    %c0_18 = arith.constant 0 : index
    %24 = vector.load %arg6[%c0_16, %c0_17, %c0_18] : memref<4x2x32xf32, #tpu.memory_space<vmem>>, vector<1x2x32xf32>
    %25 = vector.shape_cast %24 : vector<1x2x32xf32> to vector<2x32xf32>
    %26 = vector.extract_strided_slice %22 {offsets = [0, 0], sizes = [32, 4], strides = [1, 1]} : vector<32x16xf32> to vector<32x4xf32>
    %cst_19 = arith.constant dense<0.000000e+00> : vector<2x4xf32>
    %27 = tpu.matmul %25, %26, %cst_19 {dimension_numbers = #tpu.dot_dimension_numbers<[1], [0], [0], [1], [0, 0, 1, 1], [], []>} : vector<2x32xf32>, vector<32x4xf32>, vector<2x4xf32> -> vector<2x4xf32>
    %28 = arith.addf %23, %27 : vector<2x4xf32>
    %c1 = arith.constant 1 : index
    %c0_20 = arith.constant 0 : index
    %c0_21 = arith.constant 0 : index
    %29 = vector.load %arg6[%c1, %c0_20, %c0_21] : memref<4x2x32xf32, #tpu.memory_space<vmem>>, vector<1x2x32xf32>
    %30 = vector.shape_cast %29 : vector<1x2x32xf32> to vector<2x32xf32>
    %31 = vector.extract_strided_slice %22 {offsets = [0, 4], sizes = [32, 4], strides = [1, 1]} : vector<32x16xf32> to vector<32x4xf32>
    %cst_22 = arith.constant dense<0.000000e+00> : vector<2x4xf32>
    %32 = tpu.matmul %30, %31, %cst_22 {dimension_numbers = #tpu.dot_dimension_numbers<[1], [0], [0], [1], [0, 0, 1, 1], [], []>} : vector<2x32xf32>, vector<32x4xf32>, vector<2x4xf32> -> vector<2x4xf32>
    %33 = arith.addf %28, %32 : vector<2x4xf32>
    %c2 = arith.constant 2 : index
    %c0_23 = arith.constant 0 : index
    %c0_24 = arith.constant 0 : index
    %34 = vector.load %arg6[%c2, %c0_23, %c0_24] : memref<4x2x32xf32, #tpu.memory_space<vmem>>, vector<1x2x32xf32>
    %35 = vector.shape_cast %34 : vector<1x2x32xf32> to vector<2x32xf32>
    %36 = vector.extract_strided_slice %22 {offsets = [0, 8], sizes = [32, 4], strides = [1, 1]} : vector<32x16xf32> to vector<32x4xf32>
    %cst_25 = arith.constant dense<0.000000e+00> : vector<2x4xf32>
    %37 = tpu.matmul %35, %36, %cst_25 {dimension_numbers = #tpu.dot_dimension_numbers<[1], [0], [0], [1], [0, 0, 1, 1], [], []>} : vector<2x32xf32>, vector<32x4xf32>, vector<2x4xf32> -> vector<2x4xf32>
    %38 = arith.addf %33, %37 : vector<2x4xf32>
    %c3 = arith.constant 3 : index
    %c0_26 = arith.constant 0 : index
    %c0_27 = arith.constant 0 : index
    %39 = vector.load %arg6[%c3, %c0_26, %c0_27] : memref<4x2x32xf32, #tpu.memory_space<vmem>>, vector<1x2x32xf32>
    %40 = vector.shape_cast %39 : vector<1x2x32xf32> to vector<2x32xf32>
    %41 = vector.extract_strided_slice %22 {offsets = [0, 12], sizes = [32, 4], strides = [1, 1]} : vector<32x16xf32> to vector<32x4xf32>
    %cst_28 = arith.constant dense<0.000000e+00> : vector<2x4xf32>
    %42 = tpu.matmul %40, %41, %cst_28 {dimension_numbers = #tpu.dot_dimension_numbers<[1], [0], [0], [1], [0, 0, 1, 1], [], []>} : vector<2x32xf32>, vector<32x4xf32>, vector<2x4xf32> -> vector<2x4xf32>
    %43 = arith.addf %38, %42 : vector<2x4xf32>
    %c0_29 = arith.constant 0 : index
    %c0_30 = arith.constant 0 : index
    %44 = vector.load %arg7[%c0_29, %c0_30] : memref<2x1xf32, #tpu.memory_space<vmem>>, vector<2x1xf32>
    %45 = vector.broadcast %44 : vector<2x1xf32> to vector<2x4xf32>
    %46 = arith.addf %43, %45 : vector<2x4xf32>
    %cst_31 = arith.constant dense<0xFF800000> : vector<4xf32>
    %47 = vector.multi_reduction <maximumf>, %46, %cst_31 [0] : vector<2x4xf32> to vector<4xf32>
    %48 = vector.shape_cast %47 : vector<4xf32> to vector<1x4xf32>
    %49 = vector.broadcast %48 : vector<1x4xf32> to vector<2x4xf32>
    %50 = arith.subf %46, %49 : vector<2x4xf32>
    %51 = math.exp %50 : vector<2x4xf32>
    %cst_32 = arith.constant dense<0.000000e+00> : vector<4xf32>
    %52 = vector.multi_reduction <add>, %51, %cst_32 [0] : vector<2x4xf32> to vector<4xf32>
    %53 = vector.shape_cast %52 : vector<4xf32> to vector<1x4xf32>
    %54 = math.log %53 : vector<1x4xf32>
    %55 = vector.broadcast %54 : vector<1x4xf32> to vector<2x4xf32>
    %56 = arith.subf %50, %55 : vector<2x4xf32>
    %c0_33 = arith.constant 0 : index
    %c0_34 = arith.constant 0 : index
    %57 = vector.load %arg8[%c0_33, %c0_34] : memref<2x128xf32, #tpu.memory_space<vmem>>, vector<2x4xf32>
    tpu.vector_store %arg8[%c0_33, %c0_34], %56 {strides = array<i32>} : memref<2x128xf32, #tpu.memory_space<vmem>>, vector<2x4xf32>,
    return
  }
  func.func @transform_0(%arg0: i32) -> (i32, i32) {
    %c0_i32 = arith.constant 0 : i32
    %c0_i32_0 = arith.constant 0 : i32
    return %c0_i32, %arg0 : i32, i32
  }
  func.func @transform_1(%arg0: i32) -> (i32, i32) {
    %c0_i32 = arith.constant 0 : i32
    %c0_i32_0 = arith.constant 0 : i32
    %c0_i32_1 = arith.constant 0 : i32
    return %c0_i32, %c0_i32_0 : i32, i32
  }
  func.func @transform_2(%arg0: i32) -> (i32, i32) {
    %c0_i32 = arith.constant 0 : i32
    %c0_i32_0 = arith.constant 0 : i32
    %c0_i32_1 = arith.constant 0 : i32
    return %c0_i32, %c0_i32_0 : i32, i32
  }
  func.func @transform_3(%arg0: i32) -> (i32, i32) {
    %c0_i32 = arith.constant 0 : i32
    %c0_i32_0 = arith.constant 0 : i32
    %c0_i32_1 = arith.constant 0 : i32
    return %c0_i32, %c0_i32_0 : i32, i32
  }
  func.func @transform_4(%arg0: i32) -> (i32, i32) {
    %c0_i32 = arith.constant 0 : i32
    %c0_i32_0 = arith.constant 0 : i32
    %c0_i32_1 = arith.constant 0 : i32
    return %c0_i32, %c0_i32_0 : i32, i32
  }
  func.func @transform_5(%arg0: i32) -> (i32, i32, i32) {
    %c0_i32 = arith.constant 0 : i32
    %c0_i32_0 = arith.constant 0 : i32
    %c0_i32_1 = arith.constant 0 : i32
    %c0_i32_2 = arith.constant 0 : i32
    return %c0_i32, %c0_i32_0, %c0_i32_1 : i32, i32, i32
  }
  func.func @transform_6(%arg0: i32) -> (i32, i32) {
    %c0_i32 = arith.constant 0 : i32
    %c0_i32_0 = arith.constant 0 : i32
    %c0_i32_1 = arith.constant 0 : i32
    return %c0_i32, %c0_i32_0 : i32, i32
  }
  func.func @transform_7(%arg0: i32) -> (i32, i32) {
    %c0_i32 = arith.constant 0 : i32
    %c0_i32_0 = arith.constant 0 : i32
    return %c0_i32, %arg0 : i32, i32
  }
}

</mosaic_0001>

<llo_original>
// kernel: tpu_custom_call.1
$region0: #{tpu_custom_call.1}
  #allocation0 [shape = 'u32[]', space=smem, size = 0x4, offset = 0x4, fixed_abs, tag = 'smem constant byte address 0x4 - core index']
  #allocation1 [shape = 'u32[72,128]{1,0:T(1,128)}', space=vmem, size = 0x9000, scoped, tag = 'internal scratch']
  %s0 = inlined_call_operand.vmem [shape: bf16[16,256], index: 0, kind: input, shape index: {}]
  %s1 = inlined_call_operand.vmem [shape: bf16[32,16], index: 1, kind: input, shape index: {}]
  %s2 = inlined_call_operand.vmem [shape: f32[32,1], index: 2, kind: input, shape index: {}]
  %s3 = inlined_call_operand.vmem [shape: f32[128,16], index: 3, kind: input, shape index: {}]
  %s4 = inlined_call_operand.vmem [shape: f32[16,128], index: 4, kind: input, shape index: {}]
  %s5 = inlined_call_operand.vmem [shape: f32[4,2,32], index: 5, kind: input, shape index: {}]
  %s6 = inlined_call_operand.vmem [shape: f32[2,1], index: 6, kind: input, shape index: {}]
  %s7 = inlined_call_operand.hbm [shape: f32[2,256], index: 7, kind: output, shape index: {}]
  %s8 = sld [smem:[#allocation0]]
  $region102: #{tpu_custom_call.1} parent=0
    _
  %s10 = ssub.s32 1, %s8
  %s11 = scalar_select 0, %s10, %s8
  $region1: #{tpu_custom_call.1} parent=0
    #allocation2 [shape = 'u8[8192]{0}', space=vmem, size = 0x2000, scoped, tag = 'input window, operand 0']
    #allocation3 [shape = 'u8[2048]{0}', space=vmem, size = 0x800, scoped, tag = 'output window, operand 0']
    #allocation4 [shape = 's32[2]{0}', space=sflag, size = 0x8, scoped, tag = 'scoped memory for tpu_custom_call.1']
    %12 = vsyncpa [#allocation4], 0
    %s13 = scalar_lea.sflag [#allocation4], 1
    %14 = vsyncpa %s13, 0
    loop: start=0, step=1, limit=4
    $region2: #{tpu_custom_call.1} parent=1 // loop_pre_header
      _
    $region3: #{tpu_custom_call.1} parent=1 // loop_header
      %s16 = sphi 0, %s20
      %p17 = scmp.ge.s32.totalorder %s16, 4
      %s26 = sphi 0, %s28
      %s29 = sphi 0, %s26
      %s30 = sphi 0, %s29
      %s46 = sphi 0, %s30
      %s50 = sphi 0, %s50
      %s52 = sphi 0, %s50
      %s53 = sphi 0, %s52
      %s67 = sphi 0, %s53
      %s71 = sphi 0, %s71
      %s73 = sphi 0, %s71
      %s74 = sphi 0, %s73
      %s88 = sphi 0, %s74
      %s92 = sphi 0, %s92
      %s94 = sphi 0, %s92
      %s95 = sphi 0, %s94
      %s109 = sphi 0, %s95
      %s113 = sphi 0, %s113
      %s115 = sphi 0, %s113
      %s116 = sphi 0, %s115
      %s130 = sphi 0, %s116
      %s134 = sphi 0, %s134
      %s136 = sphi 0, %s134
      %s137 = sphi 0, %s136
      %s151 = sphi 0, %s137
      %s155 = sphi 0, %s155
      %s157 = sphi 0, %s155
      %s158 = sphi 0, %s157
      %s172 = sphi 0, %s158
      %s178 = sphi 0, %s180
      %s181 = sphi 0, %s178
      %s182 = sphi 0, %s181
      %s198 = sphi 0, %s182
    $region4: #{tpu_custom_call.1} parent=1 // loop_header_branch
      %19 = sbr.rel (%p17) target = $region8
    $region5: #{tpu_custom_call.1} parent=1 // loop_body
      %s21 = ssub.s32 %s16, 1
      %s22 = ssub.s32 %s16, 2
      %s23 = sadd.s32 %s16, 1
      %s24 = ssub.s32 %s16, %s23
      %p25 = scmp.eq.s32.totalorder %s24, 0
      %s27 = sadd.s32 %s26, 1
      %s28 = scalar_select %p25, %s26, %s27
      %p31 = pneg %p25
      %p32 = scmp.eq.s32.totalorder %s16, 1
      %p33 = por %p31, %p32
      %p34 = scmp.ne.s32.totalorder %s26, %s29
      %p35 = scmp.eq.s32.totalorder %s16, 0
      %p36 = por %p34, %p35
      %p37 = scmp.ne.s32.totalorder %s26, %s29
      %p38 = scmp.eq.s32.totalorder %s21, 1
      %p39 = por %p37, %p38
      %p40 = scmp.ne.s32.totalorder %s29, %s30
      %p41 = scmp.eq.s32.totalorder %s21, 0
      %p42 = por %p40, %p41
      %p43 = scmp.ne.s32.totalorder %s29, %s30
      %p44 = scmp.eq.s32.totalorder %s22, 1
      %p45 = por %p43, %p44
      %p47 = scmp.ne.s32.totalorder %s30, %s46
      %p48 = scmp.eq.s32.totalorder %s22, 0
      %p49 = por %p47, %p48
      %s51 = sadd.s32 %s50, 1
      %p54 = scmp.eq.s32.totalorder %s16, 1
      %p55 = scmp.ne.s32.totalorder %s50, %s52
      %p56 = scmp.eq.s32.totalorder %s16, 0
      %p57 = por %p55, %p56
      %p58 = scmp.ne.s32.totalorder %s50, %s52
      %p59 = scmp.eq.s32.totalorder %s21, 1
      %p60 = por %p58, %p59
      %p61 = scmp.ne.s32.totalorder %s52, %s53
      %p62 = scmp.eq.s32.totalorder %s21, 0
      %p63 = por %p61, %p62
      %p64 = scmp.ne.s32.totalorder %s52, %s53
      %p65 = scmp.eq.s32.totalorder %s22, 1
      %p66 = por %p64, %p65
      %p68 = scmp.ne.s32.totalorder %s53, %s67
      %p69 = scmp.eq.s32.totalorder %s22, 0
      %p70 = por %p68, %p69
      %s72 = sadd.s32 %s71, 1
      %p75 = scmp.eq.s32.totalorder %s16, 1
      %p76 = scmp.ne.s32.totalorder %s71, %s73
      %p77 = scmp.eq.s32.totalorder %s16, 0
      %p78 = por %p76, %p77
      %p79 = scmp.ne.s32.totalorder %s71, %s73
      %p80 = scmp.eq.s32.totalorder %s21, 1
      %p81 = por %p79, %p80
      %p82 = scmp.ne.s32.totalorder %s73, %s74
      %p83 = scmp.eq.s32.totalorder %s21, 0
      %p84 = por %p82, %p83
      %p85 = scmp.ne.s32.totalorder %s73, %s74
      %p86 = scmp.eq.s32.totalorder %s22, 1
      %p87 = por %p85, %p86
      %p89 = scmp.ne.s32.totalorder %s74, %s88
      %p90 = scmp.eq.s32.totalorder %s22, 0
      %p91 = por %p89, %p90
      %s93 = sadd.s32 %s92, 1
      %p96 = scmp.eq.s32.totalorder %s16, 1
      %p97 = scmp.ne.s32.totalorder %s92, %s94
      %p98 = scmp.eq.s32.totalorder %s16, 0
      %p99 = por %p97, %p98
      %p100 = scmp.ne.s32.totalorder %s92, %s94
      %p101 = scmp.eq.s32.totalorder %s21, 1
      %p102 = por %p100, %p101
      %p103 = scmp.ne.s32.totalorder %s94, %s95
      %p104 = scmp.eq.s32.totalorder %s21, 0
      %p105 = por %p103, %p104
      %p106 = scmp.ne.s32.totalorder %s94, %s95
      %p107 = scmp.eq.s32.totalorder %s22, 1
      %p108 = por %p106, %p107
      %p110 = scmp.ne.s32.totalorder %s95, %s109
      %p111 = scmp.eq.s32.totalorder %s22, 0
      %p112 = por %p110, %p111
      %s114 = sadd.s32 %s113, 1
      %p117 = scmp.eq.s32.totalorder %s16, 1
      %p118 = scmp.ne.s32.totalorder %s113, %s115
      %p119 = scmp.eq.s32.totalorder %s16, 0
      %p120 = por %p118, %p119
      %p121 = scmp.ne.s32.totalorder %s113, %s115
      %p122 = scmp.eq.s32.totalorder %s21, 1
      %p123 = por %p121, %p122
      %p124 = scmp.ne.s32.totalorder %s115, %s116
      %p125 = scmp.eq.s32.totalorder %s21, 0
      %p126 = por %p124, %p125
      %p127 = scmp.ne.s32.totalorder %s115, %s116
      %p128 = scmp.eq.s32.totalorder %s22, 1
      %p129 = por %p127, %p128
      %p131 = scmp.ne.s32.totalorder %s116, %s130
      %p132 = scmp.eq.s32.totalorder %s22, 0
      %p133 = por %p131, %p132
      %s135 = sadd.s32 %s134, 1
      %p138 = scmp.eq.s32.totalorder %s16, 1
      %p139 = scmp.ne.s32.totalorder %s134, %s136
      %p140 = scmp.eq.s32.totalorder %s16, 0
      %p141 = por %p139, %p140
      %p142 = scmp.ne.s32.totalorder %s134, %s136
      %p143 = scmp.eq.s32.totalorder %s21, 1
      %p144 = por %p142, %p143
      %p145 = scmp.ne.s32.totalorder %s136, %s137
      %p146 = scmp.eq.s32.totalorder %s21, 0
      %p147 = por %p145, %p146
      %p148 = scmp.ne.s32.totalorder %s136, %s137
      %p149 = scmp.eq.s32.totalorder %s22, 1
      %p150 = por %p148, %p149
      %p152 = scmp.ne.s32.totalorder %s137, %s151
      %p153 = scmp.eq.s32.totalorder %s22, 0
      %p154 = por %p152, %p153
      %s156 = sadd.s32 %s155, 1
      %p159 = scmp.eq.s32.totalorder %s16, 1
      %p160 = scmp.ne.s32.totalorder %s155, %s157
      %p161 = scmp.eq.s32.totalorder %s16, 0
      %p162 = por %p160, %p161
      %p163 = scmp.ne.s32.totalorder %s155, %s157
      %p164 = scmp.eq.s32.totalorder %s21, 1
      %p165 = por %p163, %p164
      %p166 = scmp.ne.s32.totalorder %s157, %s158
      %p167 = scmp.eq.s32.totalorder %s21, 0
      %p168 = por %p166, %p167
      %p169 = scmp.ne.s32.totalorder %s157, %s158
      %p170 = scmp.eq.s32.totalorder %s22, 1
      %p171 = por %p169, %p170
      %p173 = scmp.ne.s32.totalorder %s158, %s172
      %p174 = scmp.eq.s32.totalorder %s22, 0
      %p175 = por %p173, %p174
      %s176 = ssub.s32 %s16, %s23
      %p177 = scmp.eq.s32.totalorder %s176, 0
      %s179 = sadd.s32 %s178, 1
      %s180 = scalar_select %p177, %s178, %s179
      %p183 = pneg %p177
      %p184 = scmp.eq.s32.totalorder %s16, 1
      %p185 = por %p183, %p184
      %p186 = scmp.ne.s32.totalorder %s178, %s181
      %p187 = scmp.eq.s32.totalorder %s16, 0
      %p188 = por %p186, %p187
      %p189 = scmp.ne.s32.totalorder %s178, %s181
      %p190 = scmp.eq.s32.totalorder %s21, 1
      %p191 = por %p189, %p190
      %p192 = scmp.ne.s32.totalorder %s181, %s182
      %p193 = scmp.eq.s32.totalorder %s21, 0
      %p194 = por %p192, %p193
      %p195 = scmp.ne.s32.totalorder %s181, %s182
      %p196 = scmp.eq.s32.totalorder %s22, 1
      %p197 = por %p195, %p196
      %p199 = scmp.ne.s32.totalorder %s182, %s198
      %p200 = scmp.eq.s32.totalorder %s22, 0
      %p201 = por %p199, %p200
      %p202 = scmp.le.s32.totalorder 1, %s16
      %p203 = scmp.lt.s32.totalorder %s16, 3
      %p204 = pnand %p202, %p203
      %p205 = pneg %p204
      // Predicated region
      $region9: #{tpu_custom_call.1} parent=5 // pred_check
        _
      $region10: #{tpu_custom_call.1} parent=5 // pred_check_branch
        %207 = sbr.rel (%p204) target = $region12
      $region11: #{tpu_custom_call.1} parent=5 // pred_region
        %s208 = ssub.s32 %s16, 1
        // Predicated region
        $region13: #{tpu_custom_call.1} parent=11 // pred_check
          %p209 = pneg %p63
        $region14: #{tpu_custom_call.1} parent=11 // pred_check_branch
          %211 = sbr.rel (%p209) target = $region16
        $region15: #{tpu_custom_call.1} parent=11 // pred_region
          _
        $region16: #{tpu_custom_call.1} parent=11 // pred_fallthru
          _
        // Predicated region
        $region17: #{tpu_custom_call.1} parent=11 // pred_check
          %p212 = pneg %p84
        $region18: #{tpu_custom_call.1} parent=11 // pred_check_branch
          %214 = sbr.rel (%p212) target = $region20
        $region19: #{tpu_custom_call.1} parent=11 // pred_region
          _
        $region20: #{tpu_custom_call.1} parent=11 // pred_fallthru
          _
        // Predicated region
        $region21: #{tpu_custom_call.1} parent=11 // pred_check
          %p215 = pneg %p105
        $region22: #{tpu_custom_call.1} parent=11 // pred_check_branch
          %217 = sbr.rel (%p215) target = $region24
        $region23: #{tpu_custom_call.1} parent=11 // pred_region
          _
        $region24: #{tpu_custom_call.1} parent=11 // pred_fallthru
          _
        // Predicated region
        $region25: #{tpu_custom_call.1} parent=11 // pred_check
          %p218 = pneg %p126
        $region26: #{tpu_custom_call.1} parent=11 // pred_check_branch
          %220 = sbr.rel (%p218) target = $region28
        $region27: #{tpu_custom_call.1} parent=11 // pred_region
          _
        $region28: #{tpu_custom_call.1} parent=11 // pred_fallthru
          _
        // Predicated region
        $region29: #{tpu_custom_call.1} parent=11 // pred_check
          %p221 = pneg %p147
        $region30: #{tpu_custom_call.1} parent=11 // pred_check_branch
          %223 = sbr.rel (%p221) target = $region32
        $region31: #{tpu_custom_call.1} parent=11 // pred_region
          _
        $region32: #{tpu_custom_call.1} parent=11 // pred_fallthru
          _
        // Predicated region
        $region33: #{tpu_custom_call.1} parent=11 // pred_check
          %p224 = pneg %p168
        $region34: #{tpu_custom_call.1} parent=11 // pred_check_branch
          %226 = sbr.rel (%p224) target = $region36
        $region35: #{tpu_custom_call.1} parent=11 // pred_region
          _
        $region36: #{tpu_custom_call.1} parent=11 // pred_fallthru
          _
      $region12: #{tpu_custom_call.1} parent=5 // pred_fallthru
        _
      %p227 = scmp.lt.s32.totalorder %s16, 2
      // Predicated region
      $region37: #{tpu_custom_call.1} parent=5 // pred_check
        %p228 = pneg %p227
      $region38: #{tpu_custom_call.1} parent=5 // pred_check_branch
        %230 = sbr.rel (%p228) target = $region40
      $region39: #{tpu_custom_call.1} parent=5 // pred_region
        // Predicated region
        $region41: #{tpu_custom_call.1} parent=39 // pred_check
          %p231 = pneg %p36
        $region42: #{tpu_custom_call.1} parent=39 // pred_check_branch
          %233 = sbr.rel (%p231) target = $region44
        $region43: #{tpu_custom_call.1} parent=39 // pred_region
          %s234 = sand.u32 %s26, 1
          %s235 = sand.u32 %s26, 1
          %s236 = smul.addr %s235, 8
          %s237 = scalar_lea.vmem [#allocation2], %s236
          %s238 = smul.addr %s16, 4
          %s239 = scalar_lea.vmem %s0, %s238
          // Predicated region
          $region45: #{tpu_custom_call.1} parent=43 // pred_check
            _
          $region46: #{tpu_custom_call.1} parent=43 // pred_check_branch
            %241 = sbr.rel (0) target = $region48
          $region47: #{tpu_custom_call.1} parent=43 // pred_region
            // Predicated region
            $region49: #{tpu_custom_call.1} parent=47 // pred_check
              _
            $region50: #{tpu_custom_call.1} parent=47 // pred_check_branch
              %243 = sbr.rel target = $region52
            $region51: #{tpu_custom_call.1} parent=47 // pred_region
              // Predicated region
              $region64: #{tpu_custom_call.1} parent=51 // pred_check
                _
              $region65: #{tpu_custom_call.1} parent=51 // pred_check_branch
                %261 = sbr.rel (0) target = $region67
              $region66: #{tpu_custom_call.1} parent=51 // pred_region
                loop: start=0, step=1, limit=1
                $region68: #{tpu_custom_call.1} parent=66 // loop_pre_header
                  _
                $region69: #{tpu_custom_call.1} parent=66 // loop_header
                  %s263 = sphi 0, %s267
                  %p264 = scmp.ge.s32.totalorder %s263, 1
                  %s268 = sphi %s239, %s239
                  %s269 = sphi %s237, %s237
                $region70: #{tpu_custom_call.1} parent=66 // loop_header_branch
                  %266 = sbr.rel (%p264) target = $region74
                $region71: #{tpu_custom_call.1} parent=66 // loop_body
                  _
                $region72: #{tpu_custom_call.1} parent=66 // loop_footer
                  %s267 = sadd.s32 1, %s263
                $region73: #{tpu_custom_call.1} parent=66 // loop_footer_branch
                  %262 = sbr.rel target = $region69
                $region74: #{tpu_custom_call.1} parent=66 // loop_exit
                  _
                %s271 = ssub.s32 16, 1
                loop: start=0, step=1, limit=1
                $region75: #{tpu_custom_call.1} parent=66 // loop_pre_header
                  _
                $region76: #{tpu_custom_call.1} parent=66 // loop_header
                  %s273 = sphi 0, %s277
                  %p274 = scmp.ge.s32.totalorder %s273, 1
                  %s278 = sphi %s239, %s239
                  %s279 = sphi %s237, %s237
                $region77: #{tpu_custom_call.1} parent=66 // loop_header_branch
                  %276 = sbr.rel (%p274) target = $region81
                $region78: #{tpu_custom_call.1} parent=66 // loop_body
                  %v280 = vld [vmem:[%s278] sm:%s271]
                  %281 = vst [vmem:[%s279] sm:%s271] %v280
                  %v282 = vld [vmem:[%s278 + $0x8] sm:%s271]
                  %283 = vst [vmem:[%s279 + $0x4] sm:%s271] %v282
                $region79: #{tpu_custom_call.1} parent=66 // loop_footer
                  %s277 = sadd.s32 1, %s273
                $region80: #{tpu_custom_call.1} parent=66 // loop_footer_branch
                  %272 = sbr.rel target = $region76
                $region81: #{tpu_custom_call.1} parent=66 // loop_exit
                  _
              $region67: #{tpu_custom_call.1} parent=51 // pred_fallthru
                _
            $region52: #{tpu_custom_call.1} parent=47 // pred_fallthru
              _
            // Predicated region
            $region53: #{tpu_custom_call.1} parent=47 // pred_check
              _
            $region54: #{tpu_custom_call.1} parent=47 // pred_check_branch
              %245 = sbr.rel (0) target = $region56
            $region55: #{tpu_custom_call.1} parent=47 // pred_region
              %s247 = ssub.s32 16, 1
              loop: start=0, step=1, limit=1
              $region57: #{tpu_custom_call.1} parent=55 // loop_pre_header
                _
              $region58: #{tpu_custom_call.1} parent=55 // loop_header
                %s249 = sphi 0, %s253
                %p250 = scmp.ge.s32.totalorder %s249, 1
                %s254 = sphi %s239, %s239
                %s255 = sphi %s237, %s237
              $region59: #{tpu_custom_call.1} parent=55 // loop_header_branch
                %252 = sbr.rel (%p250) target = $region63
              $region60: #{tpu_custom_call.1} parent=55 // loop_body
                %v256 = vld [vmem:[%s254] sm:%s247]
                %257 = vst [vmem:[%s255] sm:%s247] %v256
                %v258 = vld [vmem:[%s254 + $0x8] sm:%s247]
                %259 = vst [vmem:[%s255 + $0x4] sm:%s247] %v258
              $region61: #{tpu_custom_call.1} parent=55 // loop_footer
                %s253 = sadd.s32 1, %s249
              $region62: #{tpu_custom_call.1} parent=55 // loop_footer_branch
                %248 = sbr.rel target = $region58
              $region63: #{tpu_custom_call.1} parent=55 // loop_exit
                _
            $region56: #{tpu_custom_call.1} parent=47 // pred_fallthru
              _
          $region48: #{tpu_custom_call.1} parent=43 // pred_fallthru
            _
          %284 = vnop
        $region44: #{tpu_custom_call.1} parent=39 // pred_fallthru
          _
      $region40: #{tpu_custom_call.1} parent=5 // pred_fallthru
        _
      %p285 = scmp.le.s32.totalorder 1, %s16
      %p286 = scmp.lt.s32.totalorder %s16, 3
      %p287 = pnand %p285, %p286
      %p288 = pneg %p287
      // Predicated region
      $region82: #{tpu_custom_call.1} parent=5 // pred_check
        _
      $region83: #{tpu_custom_call.1} parent=5 // pred_check_branch
        %290 = sbr.rel (%p287) target = $region85
      $region84: #{tpu_custom_call.1} parent=5 // pred_region
        %s291 = ssub.s32 %s16, 1
        %s292 = sand.u32 %s29, 1
        %s293 = sand.u32 %s29, 1
        %s294 = smul.addr %s293, 8
        %s295 = scalar_lea.vmem [#allocation2], %s294
        // Predicated region
        $region86: #{tpu_custom_call.1} parent=84 // pred_check
          %p296 = pneg %p42
        $region87: #{tpu_custom_call.1} parent=84 // pred_check_branch
          %298 = sbr.rel (%p296) target = $region89
        $region88: #{tpu_custom_call.1} parent=84 // pred_region
          _
        $region89: #{tpu_custom_call.1} parent=84 // pred_fallthru
          _
        %s299 = sand.u32 %s29, 1
        %s300 = sand.u32 %s29, 1
        %s301 = smul.addr %s300, 8
        %s302 = scalar_lea.vmem [#allocation2], %s301
        %p303 = pneg %p42
        %p304 = pneg %p39
        %p305 = pneg %p63
        %p306 = pneg %p60
        %p307 = pneg %p84
        %p308 = pneg %p81
        %p309 = pneg %p105
        %p310 = pneg %p102
        %p311 = pneg %p126
        %p312 = pneg %p123
        %p313 = pneg %p147
        %p314 = pneg %p144
        %p315 = pneg %p168
        %p316 = pneg %p165
        %p317 = pneg %p194
        %p318 = pneg %p191
        %s319 = sand.u32 %s181, 1
        %s320 = scalar_lea.sflag [#allocation4], %s319
        %s321 = sand.u32 %s181, 1
        %s322 = smul.addr %s321, 2
        %s323 = scalar_lea.vmem [#allocation3], %s322
        %v325 = vld [vmem:[%s1] sm:$0xf]
        %v326 = vld [vmem:[%s1 + $0x4] sm:$0xf]
        %v327 = vld [vmem:[%s1 + $0x8] sm:$0xf]
        %v328 = vld [vmem:[%s1 + $0xc] sm:$0xf]
        %v329 = vld [vmem:[%s295] sm:$0xf]
        %v330 = vld [vmem:[%s295 + $0x4] sm:$0xf]
        %v331 = vld [vmem:[%s2] sm:$0xff]
        %v332 = vld [vmem:[%s2 + $0x8] sm:$0xff]
        %v333 = vld [vmem:[%s2 + $0x10] sm:$0xff]
        %v334 = vld [vmem:[%s2 + $0x18] sm:$0xff]
        %336 = vset.pattern.permute.xlu0 0
        %337 = vperm.xlu0 %336, %v331
        %v338 = vpop.permute.xlu0 %337
        %341 = vset.pattern.permute.xlu0 0
        %342 = vperm.xlu0 %341, %v332
        %v343 = vpop.permute.xlu0 %342
        %346 = vset.pattern.permute.xlu0 0
        %347 = vperm.xlu0 %346, %v333
        %v348 = vpop.permute.xlu0 %347
        %351 = vset.pattern.permute.xlu0 0
        %352 = vperm.xlu0 %351, %v334
        %v353 = vpop.permute.xlu0 %352
        %v359 = vunpack.c.l.b16 %v325
        %v360 = vunpack.c.l.b16 %v326
        %v361 = vunpack.c.l.b16 %v327
        %v362 = vunpack.c.l.b16 %v328
        %v363 = vpack.c.b16 %v360, %v359
        %v364 = vpack.c.b16 %v362, %v361
        %v367 = vunpack.c.l.b16 %v329
        %v368 = vunpack.c.l.b16 %v330
        %v369 = vpack.c.b16 %v368, %v367
        %vm371 = vcmask 130048
        %v373 = vsel %vm371, %v363, 0
        %v376 = vsel %vm371, %v364, 0
        %378 = vmatpush.bf16.msra.mxu0 0
        %379 = vmatpush.bf16.msra.mxu0 0
        %380 = vmatpush.bf16.msra.mxu0 0
        %381 = vmatpush.bf16.msra.mxu0 0
        %382 = vmatpush.bf16.msra.mxu0 0
        %383 = vmatpush.bf16.msra.mxu0 0
        %384 = vmatpush.bf16.msra.mxu0 0
        %385 = vmatpush.bf16.msra.mxu0 %v369
        %386 = vmatmul.bf16.gmra.mxu0 %v373
        %v387 = vpop.f32.mrf.mxu0
        %v388 = vadd.f32 %v338, %v387
        %v389 = vpop.f32.mrf.mxu0
        %v390 = vadd.f32 %v343, %v389
        %391 = vmatmul.bf16.gmra.mxu0 %v376
        %v392 = vpop.f32.mrf.mxu0
        %v393 = vadd.f32 %v348, %v392
        %v394 = vpop.f32.mrf.mxu0
        %v395 = vadd.f32 %v353, %v394
        %396 = vdwg.mxu0
        %v397 = vxor.u32 %v388, 2147483648
        %v398 = vxor.u32 %v390, 2147483648
        %v399 = vxor.u32 %v393, 2147483648
        %v400 = vxor.u32 %v395, 2147483648
        %v401 = vmul.f32 %v397, 1.442695
        %v402 = vpow.pop %v401
        %v403 = vmul.f32 %v398, 1.442695
        %v404 = vpow.pop %v403
        %v405 = vmul.f32 %v399, 1.442695
        %v406 = vpow.pop %v405
        %v407 = vmul.f32 %v400, 1.442695
        %v408 = vpow.pop %v407
        %v409 = vadd.f32 %v402, 1.0
        %v410 = vadd.f32 %v404, 1.0
        %v411 = vadd.f32 %v406, 1.0
        %v412 = vadd.f32 %v408, 1.0
        %v413 = vrcp.pop %v409
        %v414 = vmul.f32 %v409, %v413
        %v415 = vsub.f32 1.0, %v414
        %v416 = vmul.f32 %v413, %v415
        %v417 = vadd.f32 %v413, %v416
        %vm418 = vweird.f32 %v409
        %vm419 = vweird.f32 %v413
        %vm420 = vmor %vm418, %vm419
        %v421 = vsel %vm420, %v413, %v417
        %v422 = vand.u32 2147483647, %v409
        %vm423 = vcmp.eq.f32.partialorder %v422, 8.507059e+37
        %v424 = vand.u32 %v409, 2147483648
        %v425 = vor.u32 1.1754944e-38, %v424
        %v426 = vsel %vm423, %v425, %v421
        %v427 = vmul.f32 1.0, %v426
        %v428 = vrcp.pop %v410
        %v429 = vmul.f32 %v410, %v428
        %v430 = vsub.f32 1.0, %v429
        %v431 = vmul.f32 %v428, %v430
        %v432 = vadd.f32 %v428, %v431
        %vm433 = vweird.f32 %v410
        %vm434 = vweird.f32 %v428
        %vm435 = vmor %vm433, %vm434
        %v436 = vsel %vm435, %v428, %v432
        %v437 = vand.u32 2147483647, %v410
        %vm438 = vcmp.eq.f32.partialorder %v437, 8.507059e+37
        %v439 = vand.u32 %v410, 2147483648
        %v440 = vor.u32 1.1754944e-38, %v439
        %v441 = vsel %vm438, %v440, %v436
        %v442 = vmul.f32 1.0, %v441
        %v443 = vrcp.pop %v411
        %v444 = vmul.f32 %v411, %v443
        %v445 = vsub.f32 1.0, %v444
        %v446 = vmul.f32 %v443, %v445
        %v447 = vadd.f32 %v443, %v446
        %vm448 = vweird.f32 %v411
        %vm449 = vweird.f32 %v443
        %vm450 = vmor %vm448, %vm449
        %v451 = vsel %vm450, %v443, %v447
        %v452 = vand.u32 2147483647, %v411
        %vm453 = vcmp.eq.f32.partialorder %v452, 8.507059e+37
        %v454 = vand.u32 %v411, 2147483648
        %v455 = vor.u32 1.1754944e-38, %v454
        %v456 = vsel %vm453, %v455, %v451
        %v457 = vmul.f32 1.0, %v456
        %v458 = vrcp.pop %v412
        %v459 = vmul.f32 %v412, %v458
        %v460 = vsub.f32 1.0, %v459
        %v461 = vmul.f32 %v458, %v460
        %v462 = vadd.f32 %v458, %v461
        %vm463 = vweird.f32 %v412
        %vm464 = vweird.f32 %v458
        %vm465 = vmor %vm463, %vm464
        %v466 = vsel %vm465, %v458, %v462
        %v467 = vand.u32 2147483647, %v412
        %vm468 = vcmp.eq.f32.partialorder %v467, 8.507059e+37
        %v469 = vand.u32 %v412, 2147483648
        %v470 = vor.u32 1.1754944e-38, %v469
        %v471 = vsel %vm468, %v470, %v466
        %v472 = vmul.f32 1.0, %v471
        %v473 = vmul.f32 %v388, %v427
        %v474 = vmul.f32 %v390, %v442
        %v475 = vmul.f32 %v393, %v457
        %v476 = vmul.f32 %v395, %v472
        %v477 = vld [vmem:[%s3] sm:$0xff]
        %v478 = vld [vmem:[%s3 + $0x8] sm:$0xff]
        %v479 = vld [vmem:[%s3 + $0x10] sm:$0xff]
        %v480 = vld [vmem:[%s3 + $0x18] sm:$0xff]
        %v481 = vld [vmem:[%s3 + $0x20] sm:$0xff]
        %v482 = vld [vmem:[%s3 + $0x28] sm:$0xff]
        %v483 = vld [vmem:[%s3 + $0x30] sm:$0xff]
        %v484 = vld [vmem:[%s3 + $0x38] sm:$0xff]
        %v485 = vld [vmem:[%s3 + $0x40] sm:$0xff]
        %v486 = vld [vmem:[%s3 + $0x48] sm:$0xff]
        %v487 = vld [vmem:[%s3 + $0x50] sm:$0xff]
        %v488 = vld [vmem:[%s3 + $0x58] sm:$0xff]
        %v489 = vld [vmem:[%s3 + $0x60] sm:$0xff]
        %v490 = vld [vmem:[%s3 + $0x68] sm:$0xff]
        %v491 = vld [vmem:[%s3 + $0x70] sm:$0xff]
        %v492 = vld [vmem:[%s3 + $0x78] sm:$0xff]
        %493 = vmatpush.msra.mxu0 %v492
        %494 = vmatpush.msra.mxu0 %v491
        %495 = vmatpush.msra.mxu0 %v490
        %496 = vmatpush.msra.mxu0 %v489
        %497 = vmatpush.msra.mxu0 %v488
        %498 = vmatpush.msra.mxu0 %v487
        %499 = vmatpush.msra.mxu0 %v486
        %500 = vmatpush.msra.mxu0 %v485
        %501 = vmatpush.msra.mxu0 %v484
        %502 = vmatpush.msra.mxu0 %v483
        %503 = vmatpush.msra.mxu0 %v482
        %504 = vmatpush.msra.mxu0 %v481
        %505 = vmatpush.msra.mxu0 %v480
        %506 = vmatpush.msra.mxu0 %v479
        %507 = vmatpush.msra.mxu0 %v478
        %508 = vmatpush.msra.mxu0 %v477
        %509 = vmatmul.f32.gmra.mxu0 %v473
        %v510 = vpop.f32.mrf.mxu0
        %v511 = vadd.f32 0.0, %v510
        %512 = vmatmul.f32.gmra.mxu0 %v474
        %v513 = vpop.f32.mrf.mxu0
        %v514 = vadd.f32 0.0, %v513
        %515 = vmatmul.f32.gmra.mxu0 %v475
        %v516 = vpop.f32.mrf.mxu0
        %v517 = vadd.f32 0.0, %v516
        %518 = vmatmul.f32.gmra.mxu0 %v476
        %v519 = vpop.f32.mrf.mxu0
        %v520 = vadd.f32 0.0, %v519
        %521 = vdwg.mxu0
        %v522 = vmul.f32 %v511, 0.125
        %v523 = vmul.f32 %v514, 0.125
        %v524 = vmul.f32 %v517, 0.125
        %v525 = vmul.f32 %v520, 0.125
        %v526 = vld [vmem:[%s4] sm:$0xff]
        %v527 = vld [vmem:[%s4 + $0x8] sm:$0xff]
        %v529 = vsel %vm371, %v522, 0
        %v532 = vsel %vm371, %v523, 0
        %v535 = vsel %vm371, %v524, 0
        %v538 = vsel %vm371, %v525, 0
        %540 = vmatpush.msra.mxu0 0.0
        %541 = vmatpush.msra.mxu0 0.0
        %542 = vmatpush.msra.mxu0 0.0
        %543 = vmatpush.msra.mxu0 0.0
        %544 = vmatpush.msra.mxu0 0.0
        %545 = vmatpush.msra.mxu0 0.0
        %546 = vmatpush.msra.mxu0 0.0
        %547 = vmatpush.msra.mxu0 0.0
        %548 = vmatpush.msra.mxu0 0.0
        %549 = vmatpush.msra.mxu0 0.0
        %550 = vmatpush.msra.mxu0 0.0
        %551 = vmatpush.msra.mxu0 0.0
        %552 = vmatpush.msra.mxu0 0.0
        %553 = vmatpush.msra.mxu0 0.0
        %554 = vmatpush.msra.mxu0 %v527
        %555 = vmatpush.msra.mxu0 %v526
        %556 = vmatmul.f32.gmra.mxu0 %v529
        %v557 = vpop.f32.mrf.mxu0
        %v558 = vadd.f32 0.0, %v557
        %559 = vmatmul.f32.gmra.mxu0 %v532
        %v560 = vpop.f32.mrf.mxu0
        %v561 = vadd.f32 0.0, %v560
        %562 = vmatmul.f32.gmra.mxu0 %v535
        %v563 = vpop.f32.mrf.mxu0
        %v564 = vadd.f32 0.0, %v563
        %565 = vmatmul.f32.gmra.mxu0 %v538
        %v566 = vpop.f32.mrf.mxu0
        %v567 = vadd.f32 0.0, %v566
        %568 = vdwg.mxu0
        %v569 = vsub.f32 %v473, %v558
        %v570 = vsub.f32 %v474, %v561
        %v571 = vsub.f32 %v475, %v564
        %v572 = vsub.f32 %v476, %v567
        %v573 = vmul.f32 %v569, %v569
        %v574 = vmul.f32 %v570, %v570
        %v575 = vmul.f32 %v571, %v571
        %v576 = vmul.f32 %v572, %v572
        %577 = vmatpush.msra.mxu0 %v492
        %578 = vmatpush.msra.mxu0 %v491
        %579 = vmatpush.msra.mxu0 %v490
        %580 = vmatpush.msra.mxu0 %v489
        %581 = vmatpush.msra.mxu0 %v488
        %582 = vmatpush.msra.mxu0 %v487
        %583 = vmatpush.msra.mxu0 %v486
        %584 = vmatpush.msra.mxu0 %v485
        %585 = vmatpush.msra.mxu0 %v484
        %586 = vmatpush.msra.mxu0 %v483
        %587 = vmatpush.msra.mxu0 %v482
        %588 = vmatpush.msra.mxu0 %v481
        %589 = vmatpush.msra.mxu0 %v480
        %590 = vmatpush.msra.mxu0 %v479
        %591 = vmatpush.msra.mxu0 %v478
        %592 = vmatpush.msra.mxu0 %v477
        %593 = vmatmul.f32.gmra.mxu0 %v573
        %v594 = vpop.f32.mrf.mxu0
        %v595 = vadd.f32 0.0, %v594
        %596 = vmatmul.f32.gmra.mxu0 %v574
        %v597 = vpop.f32.mrf.mxu0
        %v598 = vadd.f32 0.0, %v597
        %599 = vmatmul.f32.gmra.mxu0 %v575
        %v600 = vpop.f32.mrf.mxu0
        %v601 = vadd.f32 0.0, %v600
        %602 = vmatmul.f32.gmra.mxu0 %v576
        %v603 = vpop.f32.mrf.mxu0
        %v604 = vadd.f32 0.0, %v603
        %605 = vdwg.mxu0
        %v606 = vmul.f32 %v595, 0.14285715
        %v607 = vmul.f32 %v598, 0.14285715
        %v608 = vmul.f32 %v601, 0.14285715
        %v609 = vmul.f32 %v604, 0.14285715
        %v610 = vld [vmem:[%s5] sm:$0x3]
        %s611 = scalar_lea.vmem %s5, 2
        %v612 = vld [vmem:[%s611] sm:$0x3]
        %617 = vrot.lane.b32.xlu0 %v606, 124
        %v618 = vpop.permute.xlu0 %617
        %619 = vrot.lane.b32.xlu0 %v607, 124
        %v620 = vpop.permute.xlu0 %619
        %621 = vrot.lane.b32.xlu0 %v608, 124
        %v622 = vpop.permute.xlu0 %621
        %623 = vrot.lane.b32.xlu0 %v609, 124
        %v624 = vpop.permute.xlu0 %623
        %vm629 = vcmask 261120
        %v631 = vsel %vm629, %v612, 0
        %633 = vmatpush.msra.mxu0 0.0
        %634 = vmatpush.msra.mxu0 0.0
        %635 = vmatpush.msra.mxu0 0.0
        %636 = vmatpush.msra.mxu0 0.0
        %637 = vmatpush.msra.mxu0 0.0
        %638 = vmatpush.msra.mxu0 0.0
        %639 = vmatpush.msra.mxu0 0.0
        %640 = vmatpush.msra.mxu0 0.0
        %641 = vmatpush.msra.mxu0 0.0
        %642 = vmatpush.msra.mxu0 0.0
        %643 = vmatpush.msra.mxu0 0.0
        %644 = vmatpush.msra.mxu0 0.0
        %645 = vmatpush.msra.mxu0 %v624
        %646 = vmatpush.msra.mxu0 %v622
        %647 = vmatpush.msra.mxu0 %v620
        %648 = vmatpush.msra.mxu0 %v618
        %649 = vmatmul.f32.gmra.mxu0 %v631
        %v650 = vpop.f32.mrf.mxu0
        %v651 = vadd.f32 0.0, %v650
        %652 = vdwg.mxu0
        %v654 = vsel %vm629, %v610, 0
        %656 = vmatpush.msra.mxu0 0.0
        %657 = vmatpush.msra.mxu0 0.0
        %658 = vmatpush.msra.mxu0 0.0
        %659 = vmatpush.msra.mxu0 0.0
        %660 = vmatpush.msra.mxu0 0.0
        %661 = vmatpush.msra.mxu0 0.0
        %662 = vmatpush.msra.mxu0 0.0
        %663 = vmatpush.msra.mxu0 0.0
        %664 = vmatpush.msra.mxu0 0.0
        %665 = vmatpush.msra.mxu0 0.0
        %666 = vmatpush.msra.mxu0 0.0
        %667 = vmatpush.msra.mxu0 0.0
        %668 = vmatpush.msra.mxu0 %v609
        %669 = vmatpush.msra.mxu0 %v608
        %670 = vmatpush.msra.mxu0 %v607
        %671 = vmatpush.msra.mxu0 %v606
        %672 = vmatmul.f32.gmra.mxu0 %v654
        %v673 = vpop.f32.mrf.mxu0
        %v674 = vadd.f32 %v651, %v673
        %675 = vdwg.mxu0
        %s676 = scalar_lea.vmem %s5, 4
        %v677 = vld [vmem:[%s676] sm:$0x3]
        %678 = vrot.lane.b32.xlu0 %v606, 120
        %v679 = vpop.permute.xlu0 %678
        %680 = vrot.lane.b32.xlu0 %v607, 120
        %v681 = vpop.permute.xlu0 %680
        %682 = vrot.lane.b32.xlu0 %v608, 120
        %v683 = vpop.permute.xlu0 %682
        %684 = vrot.lane.b32.xlu0 %v609, 120
        %v685 = vpop.permute.xlu0 %684
        %v691 = vsel %vm629, %v677, 0
        %693 = vmatpush.msra.mxu0 0.0
        %694 = vmatpush.msra.mxu0 0.0
        %695 = vmatpush.msra.mxu0 0.0
        %696 = vmatpush.msra.mxu0 0.0
        %697 = vmatpush.msra.mxu0 0.0
        %698 = vmatpush.msra.mxu0 0.0
        %699 = vmatpush.msra.mxu0 0.0
        %700 = vmatpush.msra.mxu0 0.0
        %701 = vmatpush.msra.mxu0 0.0
        %702 = vmatpush.msra.mxu0 0.0
        %703 = vmatpush.msra.mxu0 0.0
        %704 = vmatpush.msra.mxu0 0.0
        %705 = vmatpush.msra.mxu0 %v685
        %706 = vmatpush.msra.mxu0 %v683
        %707 = vmatpush.msra.mxu0 %v681
        %708 = vmatpush.msra.mxu0 %v679
        %709 = vmatmul.f32.gmra.mxu0 %v691
        %v710 = vpop.f32.mrf.mxu0
        %v711 = vadd.f32 0.0, %v710
        %712 = vdwg.mxu0
        %v713 = vadd.f32 %v674, %v711
        %s714 = scalar_lea.vmem %s5, 6
        %v715 = vld [vmem:[%s714] sm:$0x3]
        %716 = vrot.lane.b32.xlu0 %v606, 116
        %v717 = vpop.permute.xlu0 %716
        %718 = vrot.lane.b32.xlu0 %v607, 116
        %v719 = vpop.permute.xlu0 %718
        %720 = vrot.lane.b32.xlu0 %v608, 116
        %v721 = vpop.permute.xlu0 %720
        %722 = vrot.lane.b32.xlu0 %v609, 116
        %v723 = vpop.permute.xlu0 %722
        %v729 = vsel %vm629, %v715, 0
        %731 = vmatpush.msra.mxu0 0.0
        %732 = vmatpush.msra.mxu0 0.0
        %733 = vmatpush.msra.mxu0 0.0
        %734 = vmatpush.msra.mxu0 0.0
        %735 = vmatpush.msra.mxu0 0.0
        %736 = vmatpush.msra.mxu0 0.0
        %737 = vmatpush.msra.mxu0 0.0
        %738 = vmatpush.msra.mxu0 0.0
        %739 = vmatpush.msra.mxu0 0.0
        %740 = vmatpush.msra.mxu0 0.0
        %741 = vmatpush.msra.mxu0 0.0
        %742 = vmatpush.msra.mxu0 0.0
        %743 = vmatpush.msra.mxu0 %v723
        %744 = vmatpush.msra.mxu0 %v721
        %745 = vmatpush.msra.mxu0 %v719
        %746 = vmatpush.msra.mxu0 %v717
        %747 = vmatmul.f32.gmra.mxu0 %v729
        %v748 = vpop.f32.mrf.mxu0
        %v749 = vadd.f32 0.0, %v748
        %750 = vdwg.mxu0
        %v751 = vadd.f32 %v713, %v749
        %v752 = vld [vmem:[%s6] sm:$0x3]
        %754 = vset.pattern.permute.xlu0 0
        %755 = vperm.xlu0 %754, %v752
        %v756 = vpop.permute.xlu0 %755
        %v758 = vadd.f32 %v751, %v756
        %vm759 = vcmask 25600
        %v760 = vsel %vm759, %v758, -inf
        %v761 = vrot.slane %v760, 4
        %v762 = vmax.f32 %v760, %v761
        %v763 = vrot.slane %v762, 2
        %v764 = vmax.f32 %v762, %v763
        %v765 = vrot.slane %v764, 1
        %v766 = vmax.f32 %v764, %v765
        %v767 = vsub.f32 %v758, %v766
        %v768 = vmul.f32 %v767, 1.442695
        %v769 = vpow.pop %v768
        %v770 = vsel %vm759, %v769, 0.0
        %v771 = vrot.slane %v770, 4
        %v772 = vadd.f32 %v770, %v771
        %v773 = vrot.slane %v772, 2
        %v774 = vadd.f32 %v772, %v773
        %v775 = vrot.slane %v774, 1
        %v776 = vadd.f32 %v774, %v775
        %v777 = vlog2.pop %v776
        %v778 = vmul.f32 %v777, 0.6931472
        %v779 = vsub.f32 %v767, %v778
        %780 = vst.msk [vmem:[%s323] sm:$0x3] %vm759, %v779
        %s781 = sand.u32 %s181, 1
        %s782 = scalar_lea.sflag [#allocation4], %s781
        %s783 = sand.u32 %s181, 1
        %s784 = smul.addr %s783, 2
        %s785 = scalar_lea.vmem [#allocation3], %s784
        // Predicated region
        $region90: #{tpu_custom_call.1} parent=84 // pred_check
          %p786 = pneg %p191
        $region91: #{tpu_custom_call.1} parent=84 // pred_check_branch
          %788 = sbr.rel (%p786) target = $region93
        $region92: #{tpu_custom_call.1} parent=84 // pred_region
          %790 = vsyncadd %s782, 0
          %s791 = smul.addr %s21, 2
          %s792 = scalar_lea.hbm %s7, %s791
          %s794 = sshll.u32 %s785, 4
          %s795 = int_to_ptr.vmem [resolvable:$true] %s794
          %s796 = sshll.u32 %s792, 4
          %s797 = int_to_ptr.hbm [resolvable:$true] %s796
          %799 = dma.vmem_to_hbm [thread:$0]  %s795, 32, %s797, %s782
        $region93: #{tpu_custom_call.1} parent=84 // pred_fallthru
          _
      $region85: #{tpu_custom_call.1} parent=5 // pred_fallthru
        _
      %p800 = scmp.le.s32.totalorder 2, %s16
      // Predicated region
      $region94: #{tpu_custom_call.1} parent=5 // pred_check
        %p801 = pneg %p800
      $region95: #{tpu_custom_call.1} parent=5 // pred_check_branch
        %803 = sbr.rel (%p801) target = $region97
      $region96: #{tpu_custom_call.1} parent=5 // pred_region
        %s804 = ssub.s32 %s16, 2
        // Predicated region
        $region98: #{tpu_custom_call.1} parent=96 // pred_check
          %p805 = pneg %p197
        $region99: #{tpu_custom_call.1} parent=96 // pred_check_branch
          %807 = sbr.rel (%p805) target = $region101
        $region100: #{tpu_custom_call.1} parent=96 // pred_region
          %s808 = sand.u32 %s182, 1
          %s809 = scalar_lea.sflag [#allocation4], %s808
          %s810 = sand.u32 %s182, 1
          %s811 = smul.addr %s810, 2
          %s812 = scalar_lea.vmem [#allocation3], %s811
          %814 = dma.done %s809, 32
        $region101: #{tpu_custom_call.1} parent=96 // pred_fallthru
          _
      $region97: #{tpu_custom_call.1} parent=5 // pred_fallthru
        _
    $region6: #{tpu_custom_call.1} parent=1 // loop_footer
      %s20 = sadd.s32 1, %s16
    $region7: #{tpu_custom_call.1} parent=1 // loop_footer_branch
      %15 = sbr.rel target = $region3
    $region8: #{tpu_custom_call.1} parent=1 // loop_exit
      _
    %815 = vsyncpa [#allocation4], 1
    %s816 = scalar_lea.sflag [#allocation4], 1
    %817 = vsyncpa %s816, 1

</llo_original>
